<compile_context>
chip_gen: v7x
topology: tpu7x:2x2x1
jax: 0.10.0
libtpu: 0.0.40
codegen_flags: <defaults>
</compile_context>

<pallas_src>
import jax
import jax.numpy as jnp
from jax import lax
from jax.experimental import pallas as pl
from jax.experimental.pallas import tpu as pltpu

N_INPUT = 1
N_HIDDEN = 32
N_LAYERS = 1


def rnn_kernel(x_ref, h0_ref, wih_t_ref, whh_t_ref, b_ref, wdec_ref, bdec_ref,
               dec_ref, hout_ref, inp_scratch, hs_scratch):
    """Single-call kernel: sequential recurrence over the time axis.

    x_ref:       (seq, batch, 1)       f32
    h0_ref:      (batch, hidden)       f32
    wih_t_ref:   (1, hidden)           f32   (= W_ih^T, input size 1)
    whh_t_ref:   (hidden, hidden)      f32   (= W_hh^T)
    b_ref:       (1, hidden)           f32   (= b_ih + b_hh)
    wdec_ref:    (1, hidden)           f32   (decoder weight, out_features=1)
    bdec_ref:    (1, 1)                f32   (decoder bias)
    dec_ref:     (seq, batch)          f32   output (sigmoid-decoded, lane-dense)
    hout_ref:    (batch, hidden)       f32   final hidden state
    inp_scratch: (seq, batch, hidden)  f32   precomputed input projection + bias
    hs_scratch:  (seq, batch, hidden)  f32   all hidden states (for the decoder)
    """
    seq_len = x_ref.shape[0]

    # Hoisted weight loads: keep W_hh^T (32x32 f32) resident across the loop.
    whh_t = whh_t_ref[...]                                  # (hidden, hidden)

    # Precompute x_t @ W_ih^T + (b_ih + b_hh) for every timestep in one
    # vectorized pass (K=1 matmul == broadcast multiply on the VPU).
    inp_scratch[...] = x_ref[...] * wih_t_ref[...] + b_ref[...]

    # Serial recurrence: each iteration is MXU dot + add + relu only.
    # The hidden state is carried as a value; the hs_scratch store is off the
    # dependency chain. seq_len is static and small -> fully unrolled.
    def step(t, h_prev):
        rec = jnp.dot(h_prev, whh_t, preferred_element_type=jnp.float32)
        h_new = jnp.maximum(inp_scratch[t] + rec, 0.0)      # relu nonlinearity
        hs_scratch[t] = h_new
        return h_new

    h_last = lax.fori_loop(0, seq_len, step, h0_ref[...], unroll=True)
    hout_ref[...] = h_last

    # Decoder (Linear(hidden -> 1) + sigmoid), hoisted out of the loop:
    # one vectorized reduce over the lane axis + one vectorized sigmoid,
    # single lane-dense (seq, batch) store.
    hs = hs_scratch[...]                                    # (seq, batch, hidden)
    logits = jnp.sum(hs * wdec_ref[...], axis=-1) + bdec_ref[...]   # (seq, batch)
    dec_ref[...] = (1.0 / (1.0 + jnp.exp(-logits))).astype(dec_ref.dtype)


def rnn_forward(x, hidden, params):
    """Wrapper mirroring RNN.forward(x, hidden) -> (decoded, hidden)."""
    seq_len, batch, _ = x.shape
    w_ih, w_hh, b_ih, b_hh, w_dec, b_dec = params

    h0 = hidden.reshape(batch, N_HIDDEN)                 # (1,B,H) -> (B,H)
    wih_t = w_ih.T                                       # (1, H)
    whh_t = w_hh.T                                       # (H, H)
    b_comb = (b_ih + b_hh).reshape(1, N_HIDDEN)          # (1, H)
    wdec = w_dec.reshape(1, N_HIDDEN)                    # (1, H)
    bdec = b_dec.reshape(1, 1)                           # (1, 1)

    vmem = pl.BlockSpec(memory_space=pltpu.MemorySpace.VMEM)
    decoded_sb, h_last = pl.pallas_call(
        rnn_kernel,
        out_shape=(jax.ShapeDtypeStruct((seq_len, batch), jnp.float32),
                   jax.ShapeDtypeStruct((batch, N_HIDDEN), jnp.float32)),
        in_specs=[vmem] * 7,
        out_specs=(vmem, vmem),
        scratch_shapes=[pltpu.VMEM((seq_len, batch, N_HIDDEN), jnp.float32),
                        pltpu.VMEM((seq_len, batch, N_HIDDEN), jnp.float32)],
    )(x.astype(jnp.float32), h0, wih_t, whh_t, b_comb, wdec, bdec)

    # Lane-dense kernel output -> PyTorch shape (seq, batch, 1) in the wrapper.
    decoded = decoded_sb.reshape(seq_len, batch, 1)
    return decoded, h_last.reshape(N_LAYERS, batch, N_HIDDEN)
    # TODO(synk): for v7x at real batch sizes, add a parallel batch grid axis
    # (dimension_semantics=("parallel",)) so both TensorCores each process an
    # independent batch slice; unnecessary at batch=2.


def init_params(key):
    """Deterministic init matching PyTorch shapes: U(-k, k), k = 1/sqrt(hidden)."""
    k = 1.0 / jnp.sqrt(jnp.float32(N_HIDDEN))
    ks = jax.random.split(key, 6)
    w_ih = jax.random.uniform(ks[0], (N_HIDDEN, N_INPUT), jnp.float32, -k, k)
    w_hh = jax.random.uniform(ks[1], (N_HIDDEN, N_HIDDEN), jnp.float32, -k, k)
    b_ih = jax.random.uniform(ks[2], (N_HIDDEN,), jnp.float32, -k, k)
    b_hh = jax.random.uniform(ks[3], (N_HIDDEN,), jnp.float32, -k, k)
    w_dec = jax.random.uniform(ks[4], (N_INPUT, N_HIDDEN), jnp.float32, -k, k)
    b_dec = jax.random.uniform(ks[5], (N_INPUT,), jnp.float32, -k, k)
    return (w_ih, w_hh, b_ih, b_hh, w_dec, b_dec)


def rnn_forward_ref(x, hidden, params):
    """Pure-JAX reference (mirrors torch nn.RNN + Linear + sigmoid)."""
    w_ih, w_hh, b_ih, b_hh, w_dec, b_dec = params
    h = hidden[0]

    def step(h, x_t):
        h_new = jax.nn.relu(x_t @ w_ih.T + b_ih + h @ w_hh.T + b_hh)
        return h_new, h_new

    h_last, outs = lax.scan(step, h, x)
    decoded = jax.nn.sigmoid(outs @ w_dec.T + b_dec)
    return decoded, h_last[None]


if __name__ == "__main__":
    key = jax.random.PRNGKey(0)
    kp, kx = jax.random.split(key)
    params = init_params(kp)

    seq_len, batch = 8, 2
    x = jax.random.normal(kx, (seq_len, batch, N_INPUT), jnp.float32)
    hidden0 = jnp.zeros((N_LAYERS, batch, N_HIDDEN), jnp.float32)  # init_hidden

    decoded, hidden = jax.block_until_ready(rnn_forward(x, hidden0, params))

    dec_ref, hid_ref = rnn_forward_ref(x, hidden0, params)
    assert decoded.shape == (seq_len, batch, 1)
    assert hidden.shape == (N_LAYERS, batch, N_HIDDEN)
    assert jnp.allclose(decoded, dec_ref, atol=1e-5, rtol=1e-5)
    assert jnp.allclose(hidden, hid_ref, atol=1e-5, rtol=1e-5)

    print("KERNEL_OK")
</pallas_src>

<mosaic_0001>
module attributes {stable_mosaic.version = 11 : i64} {
  func.func @rnn_kernel(%arg0: memref<8x2x1xf32, #tpu.memory_space<vmem>>, %arg1: memref<2x32xf32, #tpu.memory_space<vmem>>, %arg2: memref<1x32xf32, #tpu.memory_space<vmem>>, %arg3: memref<32x32xf32, #tpu.memory_space<vmem>>, %arg4: memref<1x32xf32, #tpu.memory_space<vmem>>, %arg5: memref<1x32xf32, #tpu.memory_space<vmem>>, %arg6: memref<1x1xf32, #tpu.memory_space<vmem>>, %arg7: memref<8x2xf32, #tpu.memory_space<vmem>>, %arg8: memref<2x32xf32, #tpu.memory_space<vmem>>, %arg9: memref<8x2x32xf32, #tpu.memory_space<vmem>>, %arg10: memref<8x2x32xf32, #tpu.memory_space<vmem>>) attributes {dimension_semantics = [], scalar_prefetch = 0 : i64, scratch_operands = 2 : i64, tpu.core_type = #tpu.core_type<tc>} {
    %c0 = arith.constant 0 : index
    %c0_0 = arith.constant 0 : index
    %0 = vector.load %arg3[%c0, %c0_0] : memref<32x32xf32, #tpu.memory_space<vmem>>, vector<32x32xf32>
    %c0_1 = arith.constant 0 : index
    %c0_2 = arith.constant 0 : index
    %c0_3 = arith.constant 0 : index
    %1 = vector.load %arg0[%c0_1, %c0_2, %c0_3] : memref<8x2x1xf32, #tpu.memory_space<vmem>>, vector<8x2x1xf32>
    %c0_4 = arith.constant 0 : index
    %c0_5 = arith.constant 0 : index
    %2 = vector.load %arg2[%c0_4, %c0_5] : memref<1x32xf32, #tpu.memory_space<vmem>>, vector<1x32xf32>
    %3 = vector.shape_cast %2 : vector<1x32xf32> to vector<1x1x32xf32>
    %4 = vector.broadcast %1 : vector<8x2x1xf32> to vector<8x2x32xf32>
    %5 = vector.broadcast %3 : vector<1x1x32xf32> to vector<8x2x32xf32>
    %6 = arith.mulf %4, %5 : vector<8x2x32xf32>
    %c0_6 = arith.constant 0 : index
    %c0_7 = arith.constant 0 : index
    %7 = vector.load %arg4[%c0_6, %c0_7] : memref<1x32xf32, #tpu.memory_space<vmem>>, vector<1x32xf32>
    %8 = vector.shape_cast %7 : vector<1x32xf32> to vector<1x1x32xf32>
    %9 = vector.broadcast %8 : vector<1x1x32xf32> to vector<8x2x32xf32>
    %10 = arith.addf %6, %9 : vector<8x2x32xf32>
    %c0_8 = arith.constant 0 : index
    %c0_9 = arith.constant 0 : index
    %c0_10 = arith.constant 0 : index
    %11 = vector.load %arg9[%c0_8, %c0_9, %c0_10] : memref<8x2x32xf32, #tpu.memory_space<vmem>>, vector<8x2x32xf32>
    tpu.vector_store %arg9[%c0_8, %c0_9, %c0_10], %10 {strides = array<i32>} : memref<8x2x32xf32, #tpu.memory_space<vmem>>, vector<8x2x32xf32>,
    %c0_11 = arith.constant 0 : index
    %c0_12 = arith.constant 0 : index
    %12 = vector.load %arg1[%c0_11, %c0_12] : memref<2x32xf32, #tpu.memory_space<vmem>>, vector<2x32xf32>
    %c0_i32 = arith.constant 0 : i32
    %cst = arith.constant dense<0.000000e+00> : vector<2x32xf32>
    %13 = tpu.matmul %12, %0, %cst {dimension_numbers = #tpu.dot_dimension_numbers<[1], [0], [0], [1], [0, 0, 1, 1], [], []>} : vector<2x32xf32>, vector<32x32xf32>, vector<2x32xf32> -> vector<2x32xf32>
    %14 = arith.index_cast %c0_i32 : i32 to index
    %c0_13 = arith.constant 0 : index
    %c0_14 = arith.constant 0 : index
    %15 = vector.load %arg9[%14, %c0_13, %c0_14] : memref<8x2x32xf32, #tpu.memory_space<vmem>>, vector<1x2x32xf32>
    %16 = vector.shape_cast %15 : vector<1x2x32xf32> to vector<2x32xf32>
    %17 = arith.addf %16, %13 : vector<2x32xf32>
    %cst_15 = arith.constant 0.000000e+00 : f32
    %18 = vector.broadcast %cst_15 : f32 to vector<2x32xf32>
    %19 = arith.maximumf %17, %18 : vector<2x32xf32>
    %20 = arith.index_cast %c0_i32 : i32 to index
    %c0_16 = arith.constant 0 : index
    %c0_17 = arith.constant 0 : index
    %21 = vector.load %arg10[%20, %c0_16, %c0_17] : memref<8x2x32xf32, #tpu.memory_space<vmem>>, vector<1x2x32xf32>
    %22 = vector.shape_cast %21 : vector<1x2x32xf32> to vector<2x32xf32>
    %23 = vector.shape_cast %19 : vector<2x32xf32> to vector<1x2x32xf32>
    tpu.vector_store %arg10[%20, %c0_16, %c0_17], %23 {strides = array<i32>} : memref<8x2x32xf32, #tpu.memory_space<vmem>>, vector<1x2x32xf32>,
    %c1_i32 = arith.constant 1 : i32
    %cst_18 = arith.constant dense<0.000000e+00> : vector<2x32xf32>
    %24 = tpu.matmul %19, %0, %cst_18 {dimension_numbers = #tpu.dot_dimension_numbers<[1], [0], [0], [1], [0, 0, 1, 1], [], []>} : vector<2x32xf32>, vector<32x32xf32>, vector<2x32xf32> -> vector<2x32xf32>
    %25 = arith.index_cast %c1_i32 : i32 to index
    %c0_19 = arith.constant 0 : index
    %c0_20 = arith.constant 0 : index
    %26 = vector.load %arg9[%25, %c0_19, %c0_20] : memref<8x2x32xf32, #tpu.memory_space<vmem>>, vector<1x2x32xf32>
    %27 = vector.shape_cast %26 : vector<1x2x32xf32> to vector<2x32xf32>
    %28 = arith.addf %27, %24 : vector<2x32xf32>
    %cst_21 = arith.constant 0.000000e+00 : f32
    %29 = vector.broadcast %cst_21 : f32 to vector<2x32xf32>
    %30 = arith.maximumf %28, %29 : vector<2x32xf32>
    %31 = arith.index_cast %c1_i32 : i32 to index
    %c0_22 = arith.constant 0 : index
    %c0_23 = arith.constant 0 : index
    %32 = vector.load %arg10[%31, %c0_22, %c0_23] : memref<8x2x32xf32, #tpu.memory_space<vmem>>, vector<1x2x32xf32>
    %33 = vector.shape_cast %32 : vector<1x2x32xf32> to vector<2x32xf32>
    %34 = vector.shape_cast %30 : vector<2x32xf32> to vector<1x2x32xf32>
    tpu.vector_store %arg10[%31, %c0_22, %c0_23], %34 {strides = array<i32>} : memref<8x2x32xf32, #tpu.memory_space<vmem>>, vector<1x2x32xf32>,
    %c2_i32 = arith.constant 2 : i32
    %cst_24 = arith.constant dense<0.000000e+00> : vector<2x32xf32>
    %35 = tpu.matmul %30, %0, %cst_24 {dimension_numbers = #tpu.dot_dimension_numbers<[1], [0], [0], [1], [0, 0, 1, 1], [], []>} : vector<2x32xf32>, vector<32x32xf32>, vector<2x32xf32> -> vector<2x32xf32>
    %36 = arith.index_cast %c2_i32 : i32 to index
    %c0_25 = arith.constant 0 : index
    %c0_26 = arith.constant 0 : index
    %37 = vector.load %arg9[%36, %c0_25, %c0_26] : memref<8x2x32xf32, #tpu.memory_space<vmem>>, vector<1x2x32xf32>
    %38 = vector.shape_cast %37 : vector<1x2x32xf32> to vector<2x32xf32>
    %39 = arith.addf %38, %35 : vector<2x32xf32>
    %cst_27 = arith.constant 0.000000e+00 : f32
    %40 = vector.broadcast %cst_27 : f32 to vector<2x32xf32>
    %41 = arith.maximumf %39, %40 : vector<2x32xf32>
    %42 = arith.index_cast %c2_i32 : i32 to index
    %c0_28 = arith.constant 0 : index
    %c0_29 = arith.constant 0 : index
    %43 = vector.load %arg10[%42, %c0_28, %c0_29] : memref<8x2x32xf32, #tpu.memory_space<vmem>>, vector<1x2x32xf32>
    %44 = vector.shape_cast %43 : vector<1x2x32xf32> to vector<2x32xf32>
    %45 = vector.shape_cast %41 : vector<2x32xf32> to vector<1x2x32xf32>
    tpu.vector_store %arg10[%42, %c0_28, %c0_29], %45 {strides = array<i32>} : memref<8x2x32xf32, #tpu.memory_space<vmem>>, vector<1x2x32xf32>,
    %c3_i32 = arith.constant 3 : i32
    %cst_30 = arith.constant dense<0.000000e+00> : vector<2x32xf32>
    %46 = tpu.matmul %41, %0, %cst_30 {dimension_numbers = #tpu.dot_dimension_numbers<[1], [0], [0], [1], [0, 0, 1, 1], [], []>} : vector<2x32xf32>, vector<32x32xf32>, vector<2x32xf32> -> vector<2x32xf32>
    %47 = arith.index_cast %c3_i32 : i32 to index
    %c0_31 = arith.constant 0 : index
    %c0_32 = arith.constant 0 : index
    %48 = vector.load %arg9[%47, %c0_31, %c0_32] : memref<8x2x32xf32, #tpu.memory_space<vmem>>, vector<1x2x32xf32>
    %49 = vector.shape_cast %48 : vector<1x2x32xf32> to vector<2x32xf32>
    %50 = arith.addf %49, %46 : vector<2x32xf32>
    %cst_33 = arith.constant 0.000000e+00 : f32
    %51 = vector.broadcast %cst_33 : f32 to vector<2x32xf32>
    %52 = arith.maximumf %50, %51 : vector<2x32xf32>
    %53 = arith.index_cast %c3_i32 : i32 to index
    %c0_34 = arith.constant 0 : index
    %c0_35 = arith.constant 0 : index
    %54 = vector.load %arg10[%53, %c0_34, %c0_35] : memref<8x2x32xf32, #tpu.memory_space<vmem>>, vector<1x2x32xf32>
    %55 = vector.shape_cast %54 : vector<1x2x32xf32> to vector<2x32xf32>
    %56 = vector.shape_cast %52 : vector<2x32xf32> to vector<1x2x32xf32>
    tpu.vector_store %arg10[%53, %c0_34, %c0_35], %56 {strides = array<i32>} : memref<8x2x32xf32, #tpu.memory_space<vmem>>, vector<1x2x32xf32>,
    %c4_i32 = arith.constant 4 : i32
    %cst_36 = arith.constant dense<0.000000e+00> : vector<2x32xf32>
    %57 = tpu.matmul %52, %0, %cst_36 {dimension_numbers = #tpu.dot_dimension_numbers<[1], [0], [0], [1], [0, 0, 1, 1], [], []>} : vector<2x32xf32>, vector<32x32xf32>, vector<2x32xf32> -> vector<2x32xf32>
    %58 = arith.index_cast %c4_i32 : i32 to index
    %c0_37 = arith.constant 0 : index
    %c0_38 = arith.constant 0 : index
    %59 = vector.load %arg9[%58, %c0_37, %c0_38] : memref<8x2x32xf32, #tpu.memory_space<vmem>>, vector<1x2x32xf32>
    %60 = vector.shape_cast %59 : vector<1x2x32xf32> to vector<2x32xf32>
    %61 = arith.addf %60, %57 : vector<2x32xf32>
    %cst_39 = arith.constant 0.000000e+00 : f32
    %62 = vector.broadcast %cst_39 : f32 to vector<2x32xf32>
    %63 = arith.maximumf %61, %62 : vector<2x32xf32>
    %64 = arith.index_cast %c4_i32 : i32 to index
    %c0_40 = arith.constant 0 : index
    %c0_41 = arith.constant 0 : index
    %65 = vector.load %arg10[%64, %c0_40, %c0_41] : memref<8x2x32xf32, #tpu.memory_space<vmem>>, vector<1x2x32xf32>
    %66 = vector.shape_cast %65 : vector<1x2x32xf32> to vector<2x32xf32>
    %67 = vector.shape_cast %63 : vector<2x32xf32> to vector<1x2x32xf32>
    tpu.vector_store %arg10[%64, %c0_40, %c0_41], %67 {strides = array<i32>} : memref<8x2x32xf32, #tpu.memory_space<vmem>>, vector<1x2x32xf32>,
    %c5_i32 = arith.constant 5 : i32
    %cst_42 = arith.constant dense<0.000000e+00> : vector<2x32xf32>
    %68 = tpu.matmul %63, %0, %cst_42 {dimension_numbers = #tpu.dot_dimension_numbers<[1], [0], [0], [1], [0, 0, 1, 1], [], []>} : vector<2x32xf32>, vector<32x32xf32>, vector<2x32xf32> -> vector<2x32xf32>
    %69 = arith.index_cast %c5_i32 : i32 to index
    %c0_43 = arith.constant 0 : index
    %c0_44 = arith.constant 0 : index
    %70 = vector.load %arg9[%69, %c0_43, %c0_44] : memref<8x2x32xf32, #tpu.memory_space<vmem>>, vector<1x2x32xf32>
    %71 = vector.shape_cast %70 : vector<1x2x32xf32> to vector<2x32xf32>
    %72 = arith.addf %71, %68 : vector<2x32xf32>
    %cst_45 = arith.constant 0.000000e+00 : f32
    %73 = vector.broadcast %cst_45 : f32 to vector<2x32xf32>
    %74 = arith.maximumf %72, %73 : vector<2x32xf32>
    %75 = arith.index_cast %c5_i32 : i32 to index
    %c0_46 = arith.constant 0 : index
    %c0_47 = arith.constant 0 : index
    %76 = vector.load %arg10[%75, %c0_46, %c0_47] : memref<8x2x32xf32, #tpu.memory_space<vmem>>, vector<1x2x32xf32>
    %77 = vector.shape_cast %76 : vector<1x2x32xf32> to vector<2x32xf32>
    %78 = vector.shape_cast %74 : vector<2x32xf32> to vector<1x2x32xf32>
    tpu.vector_store %arg10[%75, %c0_46, %c0_47], %78 {strides = array<i32>} : memref<8x2x32xf32, #tpu.memory_space<vmem>>, vector<1x2x32xf32>,
    %c6_i32 = arith.constant 6 : i32
    %cst_48 = arith.constant dense<0.000000e+00> : vector<2x32xf32>
    %79 = tpu.matmul %74, %0, %cst_48 {dimension_numbers = #tpu.dot_dimension_numbers<[1], [0], [0], [1], [0, 0, 1, 1], [], []>} : vector<2x32xf32>, vector<32x32xf32>, vector<2x32xf32> -> vector<2x32xf32>
    %80 = arith.index_cast %c6_i32 : i32 to index
    %c0_49 = arith.constant 0 : index
    %c0_50 = arith.constant 0 : index
    %81 = vector.load %arg9[%80, %c0_49, %c0_50] : memref<8x2x32xf32, #tpu.memory_space<vmem>>, vector<1x2x32xf32>
    %82 = vector.shape_cast %81 : vector<1x2x32xf32> to vector<2x32xf32>
    %83 = arith.addf %82, %79 : vector<2x32xf32>
    %cst_51 = arith.constant 0.000000e+00 : f32
    %84 = vector.broadcast %cst_51 : f32 to vector<2x32xf32>
    %85 = arith.maximumf %83, %84 : vector<2x32xf32>
    %86 = arith.index_cast %c6_i32 : i32 to index
    %c0_52 = arith.constant 0 : index
    %c0_53 = arith.constant 0 : index
    %87 = vector.load %arg10[%86, %c0_52, %c0_53] : memref<8x2x32xf32, #tpu.memory_space<vmem>>, vector<1x2x32xf32>
    %88 = vector.shape_cast %87 : vector<1x2x32xf32> to vector<2x32xf32>
    %89 = vector.shape_cast %85 : vector<2x32xf32> to vector<1x2x32xf32>
    tpu.vector_store %arg10[%86, %c0_52, %c0_53], %89 {strides = array<i32>} : memref<8x2x32xf32, #tpu.memory_space<vmem>>, vector<1x2x32xf32>,
    %c7_i32 = arith.constant 7 : i32
    %cst_54 = arith.constant dense<0.000000e+00> : vector<2x32xf32>
    %90 = tpu.matmul %85, %0, %cst_54 {dimension_numbers = #tpu.dot_dimension_numbers<[1], [0], [0], [1], [0, 0, 1, 1], [], []>} : vector<2x32xf32>, vector<32x32xf32>, vector<2x32xf32> -> vector<2x32xf32>
    %91 = arith.index_cast %c7_i32 : i32 to index
    %c0_55 = arith.constant 0 : index
    %c0_56 = arith.constant 0 : index
    %92 = vector.load %arg9[%91, %c0_55, %c0_56] : memref<8x2x32xf32, #tpu.memory_space<vmem>>, vector<1x2x32xf32>
    %93 = vector.shape_cast %92 : vector<1x2x32xf32> to vector<2x32xf32>
    %94 = arith.addf %93, %90 : vector<2x32xf32>
    %cst_57 = arith.constant 0.000000e+00 : f32
    %95 = vector.broadcast %cst_57 : f32 to vector<2x32xf32>
    %96 = arith.maximumf %94, %95 : vector<2x32xf32>
    %97 = arith.index_cast %c7_i32 : i32 to index
    %c0_58 = arith.constant 0 : index
    %c0_59 = arith.constant 0 : index
    %98 = vector.load %arg10[%97, %c0_58, %c0_59] : memref<8x2x32xf32, #tpu.memory_space<vmem>>, vector<1x2x32xf32>
    %99 = vector.shape_cast %98 : vector<1x2x32xf32> to vector<2x32xf32>
    %100 = vector.shape_cast %96 : vector<2x32xf32> to vector<1x2x32xf32>
    tpu.vector_store %arg10[%97, %c0_58, %c0_59], %100 {strides = array<i32>} : memref<8x2x32xf32, #tpu.memory_space<vmem>>, vector<1x2x32xf32>,
    %c8_i32 = arith.constant 8 : i32
    %c0_60 = arith.constant 0 : index
    %c0_61 = arith.constant 0 : index
    %101 = vector.load %arg8[%c0_60, %c0_61] : memref<2x32xf32, #tpu.memory_space<vmem>>, vector<2x32xf32>
    tpu.vector_store %arg8[%c0_60, %c0_61], %96 {strides = array<i32>} : memref<2x32xf32, #tpu.memory_space<vmem>>, vector<2x32xf32>,
    %c0_62 = arith.constant 0 : index
    %c0_63 = arith.constant 0 : index
    %c0_64 = arith.constant 0 : index
    %102 = vector.load %arg10[%c0_62, %c0_63, %c0_64] : memref<8x2x32xf32, #tpu.memory_space<vmem>>, vector<8x2x32xf32>
    %c0_65 = arith.constant 0 : index
    %c0_66 = arith.constant 0 : index
    %103 = vector.load %arg5[%c0_65, %c0_66] : memref<1x32xf32, #tpu.memory_space<vmem>>, vector<1x32xf32>
    %104 = vector.shape_cast %103 : vector<1x32xf32> to vector<1x1x32xf32>
    %105 = vector.broadcast %104 : vector<1x1x32xf32> to vector<8x2x32xf32>
    %106 = arith.mulf %102, %105 : vector<8x2x32xf32>
    %cst_67 = arith.constant dense<0.000000e+00> : vector<8x2xf32>
    %107 = vector.multi_reduction <add>, %106, %cst_67 [2] : vector<8x2x32xf32> to vector<8x2xf32>
    %c0_68 = arith.constant 0 : index
    %c0_69 = arith.constant 0 : index
    %108 = vector.load %arg6[%c0_68, %c0_69] : memref<1x1xf32, #tpu.memory_space<vmem>>, vector<1x1xf32>
    %109 = vector.broadcast %108 : vector<1x1xf32> to vector<8x2xf32>
    %110 = arith.addf %107, %109 : vector<8x2xf32>
    %cst_70 = arith.constant 0.000000e+00 : f32
    %111 = vector.broadcast %cst_70 : f32 to vector<8x2xf32>
    %112 = arith.subf %111, %110 : vector<8x2xf32>
    %113 = math.exp %112 : vector<8x2xf32>
    %cst_71 = arith.constant 1.000000e+00 : f32
    %114 = vector.broadcast %cst_71 : f32 to vector<8x2xf32>
    %115 = arith.addf %114, %113 : vector<8x2xf32>
    %cst_72 = arith.constant 1.000000e+00 : f32
    %116 = vector.broadcast %cst_72 : f32 to vector<8x2xf32>
    %117 = arith.divf %116, %115 : vector<8x2xf32>
    %c0_73 = arith.constant 0 : index
    %c0_74 = arith.constant 0 : index
    %118 = vector.load %arg7[%c0_73, %c0_74] : memref<8x2xf32, #tpu.memory_space<vmem>>, vector<8x2xf32>
    tpu.vector_store %arg7[%c0_73, %c0_74], %117 {strides = array<i32>} : memref<8x2xf32, #tpu.memory_space<vmem>>, vector<8x2xf32>,
    return
  }
}

</mosaic_0001>

<llo_original>
// kernel: tpu_custom_call.1
$region0: #{tpu_custom_call.1}
  #allocation0 [shape = 'u32[]', space=smem, size = 0x4, offset = 0x4, fixed_abs, tag = 'smem constant byte address 0x4 - core index']
  #allocation1 [shape = 'u32[144,128]{1,0:T(1,128)}', space=vmem, size = 0x12000, scoped, tag = 'internal scratch']
  #allocation2 [shape = 'f32[8,2,32]{2,1,0:T(2,128)}', space=vmem, size = 0x2000, scoped, tag = 'scratch operand']
  #allocation3 [shape = 'f32[8,2,32]{2,1,0:T(2,128)}', space=vmem, size = 0x2000, scoped, tag = 'scratch operand']
  #allocation4 [shape = 'f32[1,1]{1,0:T(1,128)S(1)}', space=vmem, size = 0x200, scoped, tag = 'scoped memory for tpu_custom_call.1']
  %s0 = inlined_call_operand.vmem [shape: f32[8,2,1], index: 0, kind: input, shape index: {}]
  %s1 = inlined_call_operand.hbm [shape: f32[2,32], index: 1, kind: input, shape index: {}]
  %s2 = inlined_call_operand.vmem [shape: f32[1,32], index: 2, kind: input, shape index: {}]
  %s3 = inlined_call_operand.vmem [shape: f32[32,32], index: 3, kind: input, shape index: {}]
  %s4 = inlined_call_operand.vmem [shape: f32[1,32], index: 4, kind: input, shape index: {}]
  %s5 = inlined_call_operand.vmem [shape: f32[1,32], index: 5, kind: input, shape index: {}]
  %s6 = inlined_call_operand.<no memory space> [shape: f32[1,1], index: 6, kind: input, shape index: {}]
  %s7 = inlined_call_operand.vmem [shape: f32[8,2], index: 7, kind: output, shape index: {0}]
  %s8 = inlined_call_operand.hbm [shape: f32[2,32], index: 8, kind: output, shape index: {1}]
  %9 = xla_tuple %s7, %s8
  %s10 = sld [smem:[#allocation0]]
  $region50: #{tpu_custom_call.1} parent=0
    _
  %s12 = ssub.s32 1, %s10
  %s13 = scalar_select 0, %s12, %s10
  %v14 = vstv %s6
  %15 = vst [vmem:[#allocation4] sm:$0x1] %v14
  $region1: #{tpu_custom_call.1} parent=0
    #allocation5 [shape = 'u8[1024]{0}', space=vmem, size = 0x400, scoped, tag = 'input window, operand 1, single buffered']
    #allocation6 [shape = 's32[1]{0}', space=sflag, size = 0x4, scoped, tag = 'scoped memory for tpu_custom_call.1']
    #allocation7 [shape = 's32[1]{0}', space=sflag, size = 0x4, scoped, tag = 'scoped memory for tpu_custom_call.1']
    #allocation8 [shape = 'u8[1024]{0}', space=vmem, size = 0x400, scoped, tag = 'output window, operand 1, single buffered']
    %16 = vsyncpa [#allocation6], 0
    %17 = vsyncpa [#allocation7], 0
    // Predicated region
    $region2: #{tpu_custom_call.1} parent=1 // pred_check
      _
    $region3: #{tpu_custom_call.1} parent=1 // pred_check_branch
      %19 = sbr.rel (0) target = $region5
    $region4: #{tpu_custom_call.1} parent=1 // pred_region
      _
    $region5: #{tpu_custom_call.1} parent=1 // pred_fallthru
      _
    // Predicated region
    $region6: #{tpu_custom_call.1} parent=1 // pred_check
      _
    $region7: #{tpu_custom_call.1} parent=1 // pred_check_branch
      %21 = sbr.rel (0) target = $region9
    $region8: #{tpu_custom_call.1} parent=1 // pred_region
      %s23 = ssub.s32 32, 32
      %24 = vsyncadd [#allocation6], %s23
      %s26 = sshll.u32 [#allocation5], 4
      %s27 = int_to_ptr.vmem [resolvable:$true] %s26
      %29 = dma.hbm_to_vmem [thread:$0]  %s1, 32, %s27, [#allocation6]
    $region9: #{tpu_custom_call.1} parent=1 // pred_fallthru
      _
    // Predicated region
    $region10: #{tpu_custom_call.1} parent=1 // pred_check
      _
    $region11: #{tpu_custom_call.1} parent=1 // pred_check_branch
      %31 = sbr.rel (0) target = $region13
    $region12: #{tpu_custom_call.1} parent=1 // pred_region
      _
    $region13: #{tpu_custom_call.1} parent=1 // pred_fallthru
      _
    // Predicated region
    $region14: #{tpu_custom_call.1} parent=1 // pred_check
      _
    $region15: #{tpu_custom_call.1} parent=1 // pred_check_branch
      %33 = sbr.rel (0) target = $region17
    $region16: #{tpu_custom_call.1} parent=1 // pred_region
      _
    $region17: #{tpu_custom_call.1} parent=1 // pred_fallthru
      _
    // Predicated region
    $region18: #{tpu_custom_call.1} parent=1 // pred_check
      _
    $region19: #{tpu_custom_call.1} parent=1 // pred_check_branch
      %35 = sbr.rel (0) target = $region21
    $region20: #{tpu_custom_call.1} parent=1 // pred_region
      _
    $region21: #{tpu_custom_call.1} parent=1 // pred_fallthru
      _
    // Predicated region
    $region22: #{tpu_custom_call.1} parent=1 // pred_check
      _
    $region23: #{tpu_custom_call.1} parent=1 // pred_check_branch
      %37 = sbr.rel (0) target = $region25
    $region24: #{tpu_custom_call.1} parent=1 // pred_region
      _
    $region25: #{tpu_custom_call.1} parent=1 // pred_fallthru
      _
    // Predicated region
    $region26: #{tpu_custom_call.1} parent=1 // pred_check
      _
    $region27: #{tpu_custom_call.1} parent=1 // pred_check_branch
      %39 = sbr.rel (0) target = $region29
    $region28: #{tpu_custom_call.1} parent=1 // pred_region
      _
    $region29: #{tpu_custom_call.1} parent=1 // pred_fallthru
      _
    // Predicated region
    $region30: #{tpu_custom_call.1} parent=1 // pred_check
      _
    $region31: #{tpu_custom_call.1} parent=1 // pred_check_branch
      %41 = sbr.rel (0) target = $region33
    $region32: #{tpu_custom_call.1} parent=1 // pred_region
      %42 = dma.done [#allocation6], 32
    $region33: #{tpu_custom_call.1} parent=1 // pred_fallthru
      _
    %v43 = vld [vmem:[%s3] sm:$0xff]
    %v44 = vld [vmem:[%s3 + $0x8] sm:$0xff]
    %v45 = vld [vmem:[%s3 + $0x10] sm:$0xff]
    %v46 = vld [vmem:[%s3 + $0x18] sm:$0xff]
    %v47 = vld [vmem:[%s0] sm:$0x3]
    %v48 = vld [vmem:[%s0 + $0x2] sm:$0x3]
    %v49 = vld [vmem:[%s0 + $0x4] sm:$0x3]
    %v50 = vld [vmem:[%s0 + $0x6] sm:$0x3]
    %v51 = vld [vmem:[%s0 + $0x8] sm:$0x3]
    %v52 = vld [vmem:[%s0 + $0xa] sm:$0x3]
    %v53 = vld [vmem:[%s0 + $0xc] sm:$0x3]
    %v54 = vld [vmem:[%s0 + $0xe] sm:$0x3]
    %v55 = vld [vmem:[%s2] sm:$0x1]
    %57 = vset.pattern.permute.xlu0 0
    %58 = vperm.xlu0 %57, %v47
    %v59 = vpop.permute.xlu0 %58
    %62 = vset.pattern.permute.xlu0 0
    %63 = vperm.xlu0 %62, %v48
    %v64 = vpop.permute.xlu0 %63
    %67 = vset.pattern.permute.xlu0 0
    %68 = vperm.xlu0 %67, %v49
    %v69 = vpop.permute.xlu0 %68
    %72 = vset.pattern.permute.xlu0 0
    %73 = vperm.xlu0 %72, %v50
    %v74 = vpop.permute.xlu0 %73
    %77 = vset.pattern.permute.xlu0 0
    %78 = vperm.xlu0 %77, %v51
    %v79 = vpop.permute.xlu0 %78
    %82 = vset.pattern.permute.xlu0 0
    %83 = vperm.xlu0 %82, %v52
    %v84 = vpop.permute.xlu0 %83
    %87 = vset.pattern.permute.xlu0 0
    %88 = vperm.xlu0 %87, %v53
    %v89 = vpop.permute.xlu0 %88
    %92 = vset.pattern.permute.xlu0 0
    %93 = vperm.xlu0 %92, %v54
    %v94 = vpop.permute.xlu0 %93
    %v97 = vlaneseq
    %v98 = vshrl.u32 %v97, 7
    %v99 = vsub.s32 0, %v98
    %v100 = vrot.slane %v55, %v99
    %v102 = vmul.f32 %v59, %v100
    %v103 = vmul.f32 %v64, %v100
    %v104 = vmul.f32 %v69, %v100
    %v105 = vmul.f32 %v74, %v100
    %v106 = vmul.f32 %v79, %v100
    %v107 = vmul.f32 %v84, %v100
    %v108 = vmul.f32 %v89, %v100
    %v109 = vmul.f32 %v94, %v100
    %v110 = vld [vmem:[%s4] sm:$0x1]
    %v112 = vlaneseq
    %v113 = vshrl.u32 %v112, 7
    %v114 = vsub.s32 0, %v113
    %v115 = vrot.slane %v110, %v114
    %v117 = vadd.f32 %v102, %v115
    %v118 = vadd.f32 %v103, %v115
    %v119 = vadd.f32 %v104, %v115
    %v120 = vadd.f32 %v105, %v115
    %v121 = vadd.f32 %v106, %v115
    %v122 = vadd.f32 %v107, %v115
    %v123 = vadd.f32 %v108, %v115
    %v124 = vadd.f32 %v109, %v115
    %vm125 = vcmask 254976
    %126 = vst.msk [vmem:[#allocation2] sm:$0x3] %vm125, %v117
    %127 = vst.msk [vmem:[#allocation2 + $0x2] sm:$0x3] %vm125, %v118
    %128 = vst.msk [vmem:[#allocation2 + $0x4] sm:$0x3] %vm125, %v119
    %129 = vst.msk [vmem:[#allocation2 + $0x6] sm:$0x3] %vm125, %v120
    %130 = vst.msk [vmem:[#allocation2 + $0x8] sm:$0x3] %vm125, %v121
    %131 = vst.msk [vmem:[#allocation2 + $0xa] sm:$0x3] %vm125, %v122
    %132 = vst.msk [vmem:[#allocation2 + $0xc] sm:$0x3] %vm125, %v123
    %133 = vst.msk [vmem:[#allocation2 + $0xe] sm:$0x3] %vm125, %v124
    %v134 = vld [vmem:[#allocation5] sm:$0x3]
    %vm135 = vcmask 261120
    %v137 = vsel %vm135, %v134, 0
    %139 = vmatprep.subr.mxu0 0.0
    %140 = vmatpush1.msra.mxu0 %v43
    %141 = vmatprep.subr.mxu0 0.0
    %142 = vmatpush1.msra.mxu0 %v44
    %143 = vmatprep.subr.mxu0 0.0
    %144 = vmatpush1.msra.mxu0 %v45
    %145 = vmatprep.subr.mxu0 0.0
    %146 = vmatpush1.msra.mxu0 %v46
    %147 = vmatprep.subr.mxu0 0.0
    %148 = vmatpush1.msra.mxu0 0.0
    %149 = vmatprep.subr.mxu0 0.0
    %150 = vmatpush1.msra.mxu0 0.0
    %151 = vmatprep.subr.mxu0 0.0
    %152 = vmatpush1.msra.mxu0 0.0
    %153 = vmatprep.subr.mxu0 0.0
    %154 = vmatpush1.msra.mxu0 0.0
    %155 = vmatprep.subr.mxu0 0.0
    %156 = vmatpush1.msra.mxu0 0.0
    %157 = vmatprep.subr.mxu0 0.0
    %158 = vmatpush1.msra.mxu0 0.0
    %159 = vmatprep.subr.mxu0 0.0
    %160 = vmatpush1.msra.mxu0 0.0
    %161 = vmatprep.subr.mxu0 0.0
    %162 = vmatpush1.msra.mxu0 0.0
    %163 = vmatprep.subr.mxu0 0.0
    %164 = vmatpush1.msra.mxu0 0.0
    %165 = vmatprep.subr.mxu0 0.0
    %166 = vmatpush1.msra.mxu0 0.0
    %167 = vmatprep.subr.mxu0 0.0
    %168 = vmatpush1.msra.mxu0 0.0
    %169 = vmatprep.subr.mxu0 0.0
    %170 = vmatpush1.msra.mxu0 0.0
    %171 = vmatprep.subr.mxu0 0.0
    %172 = vmatpush1.msra.mxu0 0.0
    %173 = vmatprep.subr.mxu0 0.0
    %174 = vmatpush1.msra.mxu0 0.0
    %175 = vmatprep.subr.mxu0 0.0
    %176 = vmatpush1.msra.mxu0 0.0
    %177 = vmatprep.subr.mxu0 0.0
    %178 = vmatpush1.msra.mxu0 0.0
    %179 = vmatprep.subr.mxu0 0.0
    %180 = vmatpush1.msra.mxu0 0.0
    %181 = vmatprep.subr.mxu0 0.0
    %182 = vmatpush1.msra.mxu0 0.0
    %183 = vmatprep.subr.mxu0 0.0
    %184 = vmatpush1.msra.mxu0 0.0
    %185 = vmatprep.subr.mxu0 0.0
    %186 = vmatpush1.msra.mxu0 0.0
    %187 = vmatprep.subr.mxu0 0.0
    %188 = vmatpush1.msra.mxu0 0.0
    %189 = vmatprep.subr.mxu0 0.0
    %190 = vmatpush1.msra.mxu0 0.0
    %191 = vmatprep.subr.mxu0 0.0
    %192 = vmatpush1.msra.mxu0 0.0
    %193 = vmatprep.subr.mxu0 0.0
    %194 = vmatpush1.msra.mxu0 0.0
    %195 = vmatprep.subr.mxu0 0.0
    %196 = vmatpush1.msra.mxu0 0.0
    %197 = vmatprep.subr.mxu0 0.0
    %198 = vmatpush1.msra.mxu0 0.0
    %199 = vmatprep.subr.mxu0 0.0
    %200 = vmatpush1.msra.mxu0 0.0
    %201 = vmatprep.subr.mxu0 0.0
    %202 = vmatpush1.msra.mxu0 0.0
    %203 = vmatprep.mubr.f32.mxu0 0.0
    %204 = vmatmul.mubr.f32.gmra.mrb[0].mxu0 %v137
    %v205 = vpop.f32.mrb[0].mxu0
    %v206 = vadd.f32 0.0, %v205
    %v207 = vpop.f32.mrb[0].mxu0
    %208 = vdwg.mxu0
    %v209 = vld [vmem:[#allocation2] sm:$0x3]
    %v210 = vadd.f32 %v209, %v206
    %v211 = vmax.f32 %v210, 0.0
    %212 = vst.msk [vmem:[#allocation3] sm:$0x3] %vm125, %v211
    %v214 = vsel %vm135, %v211, 0
    %216 = vmatprep.subr.mxu0 0.0
    %217 = vmatpush1.msra.mxu0 %v43
    %218 = vmatprep.subr.mxu0 0.0
    %219 = vmatpush1.msra.mxu0 %v44
    %220 = vmatprep.subr.mxu0 0.0
    %221 = vmatpush1.msra.mxu0 %v45
    %222 = vmatprep.subr.mxu0 0.0
    %223 = vmatpush1.msra.mxu0 %v46
    %224 = vmatprep.subr.mxu0 0.0
    %225 = vmatpush1.msra.mxu0 0.0
    %226 = vmatprep.subr.mxu0 0.0
    %227 = vmatpush1.msra.mxu0 0.0
    %228 = vmatprep.subr.mxu0 0.0
    %229 = vmatpush1.msra.mxu0 0.0
    %230 = vmatprep.subr.mxu0 0.0
    %231 = vmatpush1.msra.mxu0 0.0
    %232 = vmatprep.subr.mxu0 0.0
    %233 = vmatpush1.msra.mxu0 0.0
    %234 = vmatprep.subr.mxu0 0.0
    %235 = vmatpush1.msra.mxu0 0.0
    %236 = vmatprep.subr.mxu0 0.0
    %237 = vmatpush1.msra.mxu0 0.0
    %238 = vmatprep.subr.mxu0 0.0
    %239 = vmatpush1.msra.mxu0 0.0
    %240 = vmatprep.subr.mxu0 0.0
    %241 = vmatpush1.msra.mxu0 0.0
    %242 = vmatprep.subr.mxu0 0.0
    %243 = vmatpush1.msra.mxu0 0.0
    %244 = vmatprep.subr.mxu0 0.0
    %245 = vmatpush1.msra.mxu0 0.0
    %246 = vmatprep.subr.mxu0 0.0
    %247 = vmatpush1.msra.mxu0 0.0
    %248 = vmatprep.subr.mxu0 0.0
    %249 = vmatpush1.msra.mxu0 0.0
    %250 = vmatprep.subr.mxu0 0.0
    %251 = vmatpush1.msra.mxu0 0.0
    %252 = vmatprep.subr.mxu0 0.0
    %253 = vmatpush1.msra.mxu0 0.0
    %254 = vmatprep.subr.mxu0 0.0
    %255 = vmatpush1.msra.mxu0 0.0
    %256 = vmatprep.subr.mxu0 0.0
    %257 = vmatpush1.msra.mxu0 0.0
    %258 = vmatprep.subr.mxu0 0.0
    %259 = vmatpush1.msra.mxu0 0.0
    %260 = vmatprep.subr.mxu0 0.0
    %261 = vmatpush1.msra.mxu0 0.0
    %262 = vmatprep.subr.mxu0 0.0
    %263 = vmatpush1.msra.mxu0 0.0
    %264 = vmatprep.subr.mxu0 0.0
    %265 = vmatpush1.msra.mxu0 0.0
    %266 = vmatprep.subr.mxu0 0.0
    %267 = vmatpush1.msra.mxu0 0.0
    %268 = vmatprep.subr.mxu0 0.0
    %269 = vmatpush1.msra.mxu0 0.0
    %270 = vmatprep.subr.mxu0 0.0
    %271 = vmatpush1.msra.mxu0 0.0
    %272 = vmatprep.subr.mxu0 0.0
    %273 = vmatpush1.msra.mxu0 0.0
    %274 = vmatprep.subr.mxu0 0.0
    %275 = vmatpush1.msra.mxu0 0.0
    %276 = vmatprep.subr.mxu0 0.0
    %277 = vmatpush1.msra.mxu0 0.0
    %278 = vmatprep.subr.mxu0 0.0
    %279 = vmatpush1.msra.mxu0 0.0
    %280 = vmatprep.mubr.f32.mxu0 0.0
    %281 = vmatmul.mubr.f32.gmra.mrb[0].mxu0 %v214
    %v282 = vpop.f32.mrb[0].mxu0
    %v283 = vadd.f32 0.0, %v282
    %v284 = vpop.f32.mrb[0].mxu0
    %285 = vdwg.mxu0
    %s286 = scalar_lea.vmem [#allocation2], 2
    %v287 = vld [vmem:[%s286] sm:$0x3]
    %v288 = vadd.f32 %v287, %v283
    %v289 = vmax.f32 %v288, 0.0
    %s290 = scalar_lea.vmem [#allocation3], 2
    %291 = vst.msk [vmem:[%s290] sm:$0x3] %vm125, %v289
    %v293 = vsel %vm135, %v289, 0
    %295 = vmatprep.subr.mxu0 0.0
    %296 = vmatpush1.msra.mxu0 %v43
    %297 = vmatprep.subr.mxu0 0.0
    %298 = vmatpush1.msra.mxu0 %v44
    %299 = vmatprep.subr.mxu0 0.0
    %300 = vmatpush1.msra.mxu0 %v45
    %301 = vmatprep.subr.mxu0 0.0
    %302 = vmatpush1.msra.mxu0 %v46
    %303 = vmatprep.subr.mxu0 0.0
    %304 = vmatpush1.msra.mxu0 0.0
    %305 = vmatprep.subr.mxu0 0.0
    %306 = vmatpush1.msra.mxu0 0.0
    %307 = vmatprep.subr.mxu0 0.0
    %308 = vmatpush1.msra.mxu0 0.0
    %309 = vmatprep.subr.mxu0 0.0
    %310 = vmatpush1.msra.mxu0 0.0
    %311 = vmatprep.subr.mxu0 0.0
    %312 = vmatpush1.msra.mxu0 0.0
    %313 = vmatprep.subr.mxu0 0.0
    %314 = vmatpush1.msra.mxu0 0.0
    %315 = vmatprep.subr.mxu0 0.0
    %316 = vmatpush1.msra.mxu0 0.0
    %317 = vmatprep.subr.mxu0 0.0
    %318 = vmatpush1.msra.mxu0 0.0
    %319 = vmatprep.subr.mxu0 0.0
    %320 = vmatpush1.msra.mxu0 0.0
    %321 = vmatprep.subr.mxu0 0.0
    %322 = vmatpush1.msra.mxu0 0.0
    %323 = vmatprep.subr.mxu0 0.0
    %324 = vmatpush1.msra.mxu0 0.0
    %325 = vmatprep.subr.mxu0 0.0
    %326 = vmatpush1.msra.mxu0 0.0
    %327 = vmatprep.subr.mxu0 0.0
    %328 = vmatpush1.msra.mxu0 0.0
    %329 = vmatprep.subr.mxu0 0.0
    %330 = vmatpush1.msra.mxu0 0.0
    %331 = vmatprep.subr.mxu0 0.0
    %332 = vmatpush1.msra.mxu0 0.0
    %333 = vmatprep.subr.mxu0 0.0
    %334 = vmatpush1.msra.mxu0 0.0
    %335 = vmatprep.subr.mxu0 0.0
    %336 = vmatpush1.msra.mxu0 0.0
    %337 = vmatprep.subr.mxu0 0.0
    %338 = vmatpush1.msra.mxu0 0.0
    %339 = vmatprep.subr.mxu0 0.0
    %340 = vmatpush1.msra.mxu0 0.0
    %341 = vmatprep.subr.mxu0 0.0
    %342 = vmatpush1.msra.mxu0 0.0
    %343 = vmatprep.subr.mxu0 0.0
    %344 = vmatpush1.msra.mxu0 0.0
    %345 = vmatprep.subr.mxu0 0.0
    %346 = vmatpush1.msra.mxu0 0.0
    %347 = vmatprep.subr.mxu0 0.0
    %348 = vmatpush1.msra.mxu0 0.0
    %349 = vmatprep.subr.mxu0 0.0
    %350 = vmatpush1.msra.mxu0 0.0
    %351 = vmatprep.subr.mxu0 0.0
    %352 = vmatpush1.msra.mxu0 0.0
    %353 = vmatprep.subr.mxu0 0.0
    %354 = vmatpush1.msra.mxu0 0.0
    %355 = vmatprep.subr.mxu0 0.0
    %356 = vmatpush1.msra.mxu0 0.0
    %357 = vmatprep.subr.mxu0 0.0
    %358 = vmatpush1.msra.mxu0 0.0
    %359 = vmatprep.mubr.f32.mxu0 0.0
    %360 = vmatmul.mubr.f32.gmra.mrb[0].mxu0 %v293
    %v361 = vpop.f32.mrb[0].mxu0
    %v362 = vadd.f32 0.0, %v361
    %v363 = vpop.f32.mrb[0].mxu0
    %364 = vdwg.mxu0
    %s365 = scalar_lea.vmem [#allocation2], 4
    %v366 = vld [vmem:[%s365] sm:$0x3]
    %v367 = vadd.f32 %v366, %v362
    %v368 = vmax.f32 %v367, 0.0
    %s369 = scalar_lea.vmem [#allocation3], 4
    %370 = vst.msk [vmem:[%s369] sm:$0x3] %vm125, %v368
    %v372 = vsel %vm135, %v368, 0
    %374 = vmatprep.subr.mxu0 0.0
    %375 = vmatpush1.msra.mxu0 %v43
    %376 = vmatprep.subr.mxu0 0.0
    %377 = vmatpush1.msra.mxu0 %v44
    %378 = vmatprep.subr.mxu0 0.0
    %379 = vmatpush1.msra.mxu0 %v45
    %380 = vmatprep.subr.mxu0 0.0
    %381 = vmatpush1.msra.mxu0 %v46
    %382 = vmatprep.subr.mxu0 0.0
    %383 = vmatpush1.msra.mxu0 0.0
    %384 = vmatprep.subr.mxu0 0.0
    %385 = vmatpush1.msra.mxu0 0.0
    %386 = vmatprep.subr.mxu0 0.0
    %387 = vmatpush1.msra.mxu0 0.0
    %388 = vmatprep.subr.mxu0 0.0
    %389 = vmatpush1.msra.mxu0 0.0
    %390 = vmatprep.subr.mxu0 0.0
    %391 = vmatpush1.msra.mxu0 0.0
    %392 = vmatprep.subr.mxu0 0.0
    %393 = vmatpush1.msra.mxu0 0.0
    %394 = vmatprep.subr.mxu0 0.0
    %395 = vmatpush1.msra.mxu0 0.0
    %396 = vmatprep.subr.mxu0 0.0
    %397 = vmatpush1.msra.mxu0 0.0
    %398 = vmatprep.subr.mxu0 0.0
    %399 = vmatpush1.msra.mxu0 0.0
    %400 = vmatprep.subr.mxu0 0.0
    %401 = vmatpush1.msra.mxu0 0.0
    %402 = vmatprep.subr.mxu0 0.0
    %403 = vmatpush1.msra.mxu0 0.0
    %404 = vmatprep.subr.mxu0 0.0
    %405 = vmatpush1.msra.mxu0 0.0
    %406 = vmatprep.subr.mxu0 0.0
    %407 = vmatpush1.msra.mxu0 0.0
    %408 = vmatprep.subr.mxu0 0.0
    %409 = vmatpush1.msra.mxu0 0.0
    %410 = vmatprep.subr.mxu0 0.0
    %411 = vmatpush1.msra.mxu0 0.0
    %412 = vmatprep.subr.mxu0 0.0
    %413 = vmatpush1.msra.mxu0 0.0
    %414 = vmatprep.subr.mxu0 0.0
    %415 = vmatpush1.msra.mxu0 0.0
    %416 = vmatprep.subr.mxu0 0.0
    %417 = vmatpush1.msra.mxu0 0.0
    %418 = vmatprep.subr.mxu0 0.0
    %419 = vmatpush1.msra.mxu0 0.0
    %420 = vmatprep.subr.mxu0 0.0
    %421 = vmatpush1.msra.mxu0 0.0
    %422 = vmatprep.subr.mxu0 0.0
    %423 = vmatpush1.msra.mxu0 0.0
    %424 = vmatprep.subr.mxu0 0.0
    %425 = vmatpush1.msra.mxu0 0.0
    %426 = vmatprep.subr.mxu0 0.0
    %427 = vmatpush1.msra.mxu0 0.0
    %428 = vmatprep.subr.mxu0 0.0
    %429 = vmatpush1.msra.mxu0 0.0
    %430 = vmatprep.subr.mxu0 0.0
    %431 = vmatpush1.msra.mxu0 0.0
    %432 = vmatprep.subr.mxu0 0.0
    %433 = vmatpush1.msra.mxu0 0.0
    %434 = vmatprep.subr.mxu0 0.0
    %435 = vmatpush1.msra.mxu0 0.0
    %436 = vmatprep.subr.mxu0 0.0
    %437 = vmatpush1.msra.mxu0 0.0
    %438 = vmatprep.mubr.f32.mxu0 0.0
    %439 = vmatmul.mubr.f32.gmra.mrb[0].mxu0 %v372
    %v440 = vpop.f32.mrb[0].mxu0
    %v441 = vadd.f32 0.0, %v440
    %v442 = vpop.f32.mrb[0].mxu0
    %443 = vdwg.mxu0
    %s444 = scalar_lea.vmem [#allocation2], 6
    %v445 = vld [vmem:[%s444] sm:$0x3]
    %v446 = vadd.f32 %v445, %v441
    %v447 = vmax.f32 %v446, 0.0
    %s448 = scalar_lea.vmem [#allocation3], 6
    %449 = vst.msk [vmem:[%s448] sm:$0x3] %vm125, %v447
    %v451 = vsel %vm135, %v447, 0
    %453 = vmatprep.subr.mxu0 0.0
    %454 = vmatpush1.msra.mxu0 %v43
    %455 = vmatprep.subr.mxu0 0.0
    %456 = vmatpush1.msra.mxu0 %v44
    %457 = vmatprep.subr.mxu0 0.0
    %458 = vmatpush1.msra.mxu0 %v45
    %459 = vmatprep.subr.mxu0 0.0
    %460 = vmatpush1.msra.mxu0 %v46
    %461 = vmatprep.subr.mxu0 0.0
    %462 = vmatpush1.msra.mxu0 0.0
    %463 = vmatprep.subr.mxu0 0.0
    %464 = vmatpush1.msra.mxu0 0.0
    %465 = vmatprep.subr.mxu0 0.0
    %466 = vmatpush1.msra.mxu0 0.0
    %467 = vmatprep.subr.mxu0 0.0
    %468 = vmatpush1.msra.mxu0 0.0
    %469 = vmatprep.subr.mxu0 0.0
    %470 = vmatpush1.msra.mxu0 0.0
    %471 = vmatprep.subr.mxu0 0.0
    %472 = vmatpush1.msra.mxu0 0.0
    %473 = vmatprep.subr.mxu0 0.0
    %474 = vmatpush1.msra.mxu0 0.0
    %475 = vmatprep.subr.mxu0 0.0
    %476 = vmatpush1.msra.mxu0 0.0
    %477 = vmatprep.subr.mxu0 0.0
    %478 = vmatpush1.msra.mxu0 0.0
    %479 = vmatprep.subr.mxu0 0.0
    %480 = vmatpush1.msra.mxu0 0.0
    %481 = vmatprep.subr.mxu0 0.0
    %482 = vmatpush1.msra.mxu0 0.0
    %483 = vmatprep.subr.mxu0 0.0
    %484 = vmatpush1.msra.mxu0 0.0
    %485 = vmatprep.subr.mxu0 0.0
    %486 = vmatpush1.msra.mxu0 0.0
    %487 = vmatprep.subr.mxu0 0.0
    %488 = vmatpush1.msra.mxu0 0.0
    %489 = vmatprep.subr.mxu0 0.0
    %490 = vmatpush1.msra.mxu0 0.0
    %491 = vmatprep.subr.mxu0 0.0
    %492 = vmatpush1.msra.mxu0 0.0
    %493 = vmatprep.subr.mxu0 0.0
    %494 = vmatpush1.msra.mxu0 0.0
    %495 = vmatprep.subr.mxu0 0.0
    %496 = vmatpush1.msra.mxu0 0.0
    %497 = vmatprep.subr.mxu0 0.0
    %498 = vmatpush1.msra.mxu0 0.0
    %499 = vmatprep.subr.mxu0 0.0
    %500 = vmatpush1.msra.mxu0 0.0
    %501 = vmatprep.subr.mxu0 0.0
    %502 = vmatpush1.msra.mxu0 0.0
    %503 = vmatprep.subr.mxu0 0.0
    %504 = vmatpush1.msra.mxu0 0.0
    %505 = vmatprep.subr.mxu0 0.0
    %506 = vmatpush1.msra.mxu0 0.0
    %507 = vmatprep.subr.mxu0 0.0
    %508 = vmatpush1.msra.mxu0 0.0
    %509 = vmatprep.subr.mxu0 0.0
    %510 = vmatpush1.msra.mxu0 0.0
    %511 = vmatprep.subr.mxu0 0.0
    %512 = vmatpush1.msra.mxu0 0.0
    %513 = vmatprep.subr.mxu0 0.0
    %514 = vmatpush1.msra.mxu0 0.0
    %515 = vmatprep.subr.mxu0 0.0
    %516 = vmatpush1.msra.mxu0 0.0
    %517 = vmatprep.mubr.f32.mxu0 0.0
    %518 = vmatmul.mubr.f32.gmra.mrb[0].mxu0 %v451
    %v519 = vpop.f32.mrb[0].mxu0
    %v520 = vadd.f32 0.0, %v519
    %v521 = vpop.f32.mrb[0].mxu0
    %522 = vdwg.mxu0
    %s523 = scalar_lea.vmem [#allocation2], 8
    %v524 = vld [vmem:[%s523] sm:$0x3]
    %v525 = vadd.f32 %v524, %v520
    %v526 = vmax.f32 %v525, 0.0
    %s527 = scalar_lea.vmem [#allocation3], 8
    %528 = vst.msk [vmem:[%s527] sm:$0x3] %vm125, %v526
    %v530 = vsel %vm135, %v526, 0
    %532 = vmatprep.subr.mxu0 0.0
    %533 = vmatpush1.msra.mxu0 %v43
    %534 = vmatprep.subr.mxu0 0.0
    %535 = vmatpush1.msra.mxu0 %v44
    %536 = vmatprep.subr.mxu0 0.0
    %537 = vmatpush1.msra.mxu0 %v45
    %538 = vmatprep.subr.mxu0 0.0
    %539 = vmatpush1.msra.mxu0 %v46
    %540 = vmatprep.subr.mxu0 0.0
    %541 = vmatpush1.msra.mxu0 0.0
    %542 = vmatprep.subr.mxu0 0.0
    %543 = vmatpush1.msra.mxu0 0.0
    %544 = vmatprep.subr.mxu0 0.0
    %545 = vmatpush1.msra.mxu0 0.0
    %546 = vmatprep.subr.mxu0 0.0
    %547 = vmatpush1.msra.mxu0 0.0
    %548 = vmatprep.subr.mxu0 0.0
    %549 = vmatpush1.msra.mxu0 0.0
    %550 = vmatprep.subr.mxu0 0.0
    %551 = vmatpush1.msra.mxu0 0.0
    %552 = vmatprep.subr.mxu0 0.0
    %553 = vmatpush1.msra.mxu0 0.0
    %554 = vmatprep.subr.mxu0 0.0
    %555 = vmatpush1.msra.mxu0 0.0
    %556 = vmatprep.subr.mxu0 0.0
    %557 = vmatpush1.msra.mxu0 0.0
    %558 = vmatprep.subr.mxu0 0.0
    %559 = vmatpush1.msra.mxu0 0.0
    %560 = vmatprep.subr.mxu0 0.0
    %561 = vmatpush1.msra.mxu0 0.0
    %562 = vmatprep.subr.mxu0 0.0
    %563 = vmatpush1.msra.mxu0 0.0
    %564 = vmatprep.subr.mxu0 0.0
    %565 = vmatpush1.msra.mxu0 0.0
    %566 = vmatprep.subr.mxu0 0.0
    %567 = vmatpush1.msra.mxu0 0.0
    %568 = vmatprep.subr.mxu0 0.0
    %569 = vmatpush1.msra.mxu0 0.0
    %570 = vmatprep.subr.mxu0 0.0
    %571 = vmatpush1.msra.mxu0 0.0
    %572 = vmatprep.subr.mxu0 0.0
    %573 = vmatpush1.msra.mxu0 0.0
    %574 = vmatprep.subr.mxu0 0.0
    %575 = vmatpush1.msra.mxu0 0.0
    %576 = vmatprep.subr.mxu0 0.0
    %577 = vmatpush1.msra.mxu0 0.0
    %578 = vmatprep.subr.mxu0 0.0
    %579 = vmatpush1.msra.mxu0 0.0
    %580 = vmatprep.subr.mxu0 0.0
    %581 = vmatpush1.msra.mxu0 0.0
    %582 = vmatprep.subr.mxu0 0.0
    %583 = vmatpush1.msra.mxu0 0.0
    %584 = vmatprep.subr.mxu0 0.0
    %585 = vmatpush1.msra.mxu0 0.0
    %586 = vmatprep.subr.mxu0 0.0
    %587 = vmatpush1.msra.mxu0 0.0
    %588 = vmatprep.subr.mxu0 0.0
    %589 = vmatpush1.msra.mxu0 0.0
    %590 = vmatprep.subr.mxu0 0.0
    %591 = vmatpush1.msra.mxu0 0.0
    %592 = vmatprep.subr.mxu0 0.0
    %593 = vmatpush1.msra.mxu0 0.0
    %594 = vmatprep.subr.mxu0 0.0
    %595 = vmatpush1.msra.mxu0 0.0
    %596 = vmatprep.mubr.f32.mxu0 0.0
    %597 = vmatmul.mubr.f32.gmra.mrb[0].mxu0 %v530
    %v598 = vpop.f32.mrb[0].mxu0
    %v599 = vadd.f32 0.0, %v598
    %v600 = vpop.f32.mrb[0].mxu0
    %601 = vdwg.mxu0
    %s602 = scalar_lea.vmem [#allocation2], 10
    %v603 = vld [vmem:[%s602] sm:$0x3]
    %v604 = vadd.f32 %v603, %v599
    %v605 = vmax.f32 %v604, 0.0
    %s606 = scalar_lea.vmem [#allocation3], 10
    %607 = vst.msk [vmem:[%s606] sm:$0x3] %vm125, %v605
    %v609 = vsel %vm135, %v605, 0
    %611 = vmatprep.subr.mxu0 0.0
    %612 = vmatpush1.msra.mxu0 %v43
    %613 = vmatprep.subr.mxu0 0.0
    %614 = vmatpush1.msra.mxu0 %v44
    %615 = vmatprep.subr.mxu0 0.0
    %616 = vmatpush1.msra.mxu0 %v45
    %617 = vmatprep.subr.mxu0 0.0
    %618 = vmatpush1.msra.mxu0 %v46
    %619 = vmatprep.subr.mxu0 0.0
    %620 = vmatpush1.msra.mxu0 0.0
    %621 = vmatprep.subr.mxu0 0.0
    %622 = vmatpush1.msra.mxu0 0.0
    %623 = vmatprep.subr.mxu0 0.0
    %624 = vmatpush1.msra.mxu0 0.0
    %625 = vmatprep.subr.mxu0 0.0
    %626 = vmatpush1.msra.mxu0 0.0
    %627 = vmatprep.subr.mxu0 0.0
    %628 = vmatpush1.msra.mxu0 0.0
    %629 = vmatprep.subr.mxu0 0.0
    %630 = vmatpush1.msra.mxu0 0.0
    %631 = vmatprep.subr.mxu0 0.0
    %632 = vmatpush1.msra.mxu0 0.0
    %633 = vmatprep.subr.mxu0 0.0
    %634 = vmatpush1.msra.mxu0 0.0
    %635 = vmatprep.subr.mxu0 0.0
    %636 = vmatpush1.msra.mxu0 0.0
    %637 = vmatprep.subr.mxu0 0.0
    %638 = vmatpush1.msra.mxu0 0.0
    %639 = vmatprep.subr.mxu0 0.0
    %640 = vmatpush1.msra.mxu0 0.0
    %641 = vmatprep.subr.mxu0 0.0
    %642 = vmatpush1.msra.mxu0 0.0
    %643 = vmatprep.subr.mxu0 0.0
    %644 = vmatpush1.msra.mxu0 0.0
    %645 = vmatprep.subr.mxu0 0.0
    %646 = vmatpush1.msra.mxu0 0.0
    %647 = vmatprep.subr.mxu0 0.0
    %648 = vmatpush1.msra.mxu0 0.0
    %649 = vmatprep.subr.mxu0 0.0
    %650 = vmatpush1.msra.mxu0 0.0
    %651 = vmatprep.subr.mxu0 0.0
    %652 = vmatpush1.msra.mxu0 0.0
    %653 = vmatprep.subr.mxu0 0.0
    %654 = vmatpush1.msra.mxu0 0.0
    %655 = vmatprep.subr.mxu0 0.0
    %656 = vmatpush1.msra.mxu0 0.0
    %657 = vmatprep.subr.mxu0 0.0
    %658 = vmatpush1.msra.mxu0 0.0
    %659 = vmatprep.subr.mxu0 0.0
    %660 = vmatpush1.msra.mxu0 0.0
    %661 = vmatprep.subr.mxu0 0.0
    %662 = vmatpush1.msra.mxu0 0.0
    %663 = vmatprep.subr.mxu0 0.0
    %664 = vmatpush1.msra.mxu0 0.0
    %665 = vmatprep.subr.mxu0 0.0
    %666 = vmatpush1.msra.mxu0 0.0
    %667 = vmatprep.subr.mxu0 0.0
    %668 = vmatpush1.msra.mxu0 0.0
    %669 = vmatprep.subr.mxu0 0.0
    %670 = vmatpush1.msra.mxu0 0.0
    %671 = vmatprep.subr.mxu0 0.0
    %672 = vmatpush1.msra.mxu0 0.0
    %673 = vmatprep.subr.mxu0 0.0
    %674 = vmatpush1.msra.mxu0 0.0
    %675 = vmatprep.mubr.f32.mxu0 0.0
    %676 = vmatmul.mubr.f32.gmra.mrb[0].mxu0 %v609
    %v677 = vpop.f32.mrb[0].mxu0
    %v678 = vadd.f32 0.0, %v677
    %v679 = vpop.f32.mrb[0].mxu0
    %680 = vdwg.mxu0
    %s681 = scalar_lea.vmem [#allocation2], 12
    %v682 = vld [vmem:[%s681] sm:$0x3]
    %v683 = vadd.f32 %v682, %v678
    %v684 = vmax.f32 %v683, 0.0
    %s685 = scalar_lea.vmem [#allocation3], 12
    %686 = vst.msk [vmem:[%s685] sm:$0x3] %vm125, %v684
    %v688 = vsel %vm135, %v684, 0
    %690 = vmatprep.subr.mxu0 0.0
    %691 = vmatpush1.msra.mxu0 %v43
    %692 = vmatprep.subr.mxu0 0.0
    %693 = vmatpush1.msra.mxu0 %v44
    %694 = vmatprep.subr.mxu0 0.0
    %695 = vmatpush1.msra.mxu0 %v45
    %696 = vmatprep.subr.mxu0 0.0
    %697 = vmatpush1.msra.mxu0 %v46
    %698 = vmatprep.subr.mxu0 0.0
    %699 = vmatpush1.msra.mxu0 0.0
    %700 = vmatprep.subr.mxu0 0.0
    %701 = vmatpush1.msra.mxu0 0.0
    %702 = vmatprep.subr.mxu0 0.0
    %703 = vmatpush1.msra.mxu0 0.0
    %704 = vmatprep.subr.mxu0 0.0
    %705 = vmatpush1.msra.mxu0 0.0
    %706 = vmatprep.subr.mxu0 0.0
    %707 = vmatpush1.msra.mxu0 0.0
    %708 = vmatprep.subr.mxu0 0.0
    %709 = vmatpush1.msra.mxu0 0.0
    %710 = vmatprep.subr.mxu0 0.0
    %711 = vmatpush1.msra.mxu0 0.0
    %712 = vmatprep.subr.mxu0 0.0
    %713 = vmatpush1.msra.mxu0 0.0
    %714 = vmatprep.subr.mxu0 0.0
    %715 = vmatpush1.msra.mxu0 0.0
    %716 = vmatprep.subr.mxu0 0.0
    %717 = vmatpush1.msra.mxu0 0.0
    %718 = vmatprep.subr.mxu0 0.0
    %719 = vmatpush1.msra.mxu0 0.0
    %720 = vmatprep.subr.mxu0 0.0
    %721 = vmatpush1.msra.mxu0 0.0
    %722 = vmatprep.subr.mxu0 0.0
    %723 = vmatpush1.msra.mxu0 0.0
    %724 = vmatprep.subr.mxu0 0.0
    %725 = vmatpush1.msra.mxu0 0.0
    %726 = vmatprep.subr.mxu0 0.0
    %727 = vmatpush1.msra.mxu0 0.0
    %728 = vmatprep.subr.mxu0 0.0
    %729 = vmatpush1.msra.mxu0 0.0
    %730 = vmatprep.subr.mxu0 0.0
    %731 = vmatpush1.msra.mxu0 0.0
    %732 = vmatprep.subr.mxu0 0.0
    %733 = vmatpush1.msra.mxu0 0.0
    %734 = vmatprep.subr.mxu0 0.0
    %735 = vmatpush1.msra.mxu0 0.0
    %736 = vmatprep.subr.mxu0 0.0
    %737 = vmatpush1.msra.mxu0 0.0
    %738 = vmatprep.subr.mxu0 0.0
    %739 = vmatpush1.msra.mxu0 0.0
    %740 = vmatprep.subr.mxu0 0.0
    %741 = vmatpush1.msra.mxu0 0.0
    %742 = vmatprep.subr.mxu0 0.0
    %743 = vmatpush1.msra.mxu0 0.0
    %744 = vmatprep.subr.mxu0 0.0
    %745 = vmatpush1.msra.mxu0 0.0
    %746 = vmatprep.subr.mxu0 0.0
    %747 = vmatpush1.msra.mxu0 0.0
    %748 = vmatprep.subr.mxu0 0.0
    %749 = vmatpush1.msra.mxu0 0.0
    %750 = vmatprep.subr.mxu0 0.0
    %751 = vmatpush1.msra.mxu0 0.0
    %752 = vmatprep.subr.mxu0 0.0
    %753 = vmatpush1.msra.mxu0 0.0
    %754 = vmatprep.mubr.f32.mxu0 0.0
    %755 = vmatmul.mubr.f32.gmra.mrb[0].mxu0 %v688
    %v756 = vpop.f32.mrb[0].mxu0
    %v757 = vadd.f32 0.0, %v756
    %v758 = vpop.f32.mrb[0].mxu0
    %759 = vdwg.mxu0
    %s760 = scalar_lea.vmem [#allocation2], 14
    %v761 = vld [vmem:[%s760] sm:$0x3]
    %v762 = vadd.f32 %v761, %v757
    %v763 = vmax.f32 %v762, 0.0
    %s764 = scalar_lea.vmem [#allocation3], 14
    %765 = vst.msk [vmem:[%s764] sm:$0x3] %vm125, %v763
    %766 = vst.msk [vmem:[#allocation8] sm:$0x3] %vm125, %v763
    %v767 = vld [vmem:[#allocation3] sm:$0x3]
    %v768 = vld [vmem:[#allocation3 + $0x2] sm:$0x3]
    %v769 = vld [vmem:[#allocation3 + $0x4] sm:$0x3]
    %v770 = vld [vmem:[#allocation3 + $0x6] sm:$0x3]
    %v771 = vld [vmem:[#allocation3 + $0x8] sm:$0x3]
    %v772 = vld [vmem:[#allocation3 + $0xa] sm:$0x3]
    %v773 = vld [vmem:[#allocation3 + $0xc] sm:$0x3]
    %v774 = vld [vmem:[#allocation3 + $0xe] sm:$0x3]
    %v775 = vld [vmem:[%s5] sm:$0x1]
    %v777 = vlaneseq
    %v778 = vshrl.u32 %v777, 7
    %v779 = vsub.s32 0, %v778
    %v780 = vrot.slane %v775, %v779
    %v782 = vmul.f32 %v767, %v780
    %v783 = vmul.f32 %v768, %v780
    %v784 = vmul.f32 %v769, %v780
    %v785 = vmul.f32 %v770, %v780
    %v786 = vmul.f32 %v771, %v780
    %v787 = vmul.f32 %v772, %v780
    %v788 = vmul.f32 %v773, %v780
    %v789 = vmul.f32 %v774, %v780
    %v790 = vsel %vm125, %v782, 0.0
    %791 = vadd.xlane.f32.xlu0 %v790
    %v792 = vpop.xlane.xlu0 %791
    %v793 = vsel %vm125, %v783, 0.0
    %794 = vadd.xlane.f32.xlu0 %v793
    %v795 = vpop.xlane.xlu0 %794
    %v796 = vsel %vm125, %v784, 0.0
    %797 = vadd.xlane.f32.xlu0 %v796
    %v798 = vpop.xlane.xlu0 %797
    %v799 = vsel %vm125, %v785, 0.0
    %800 = vadd.xlane.f32.xlu0 %v799
    %v801 = vpop.xlane.xlu0 %800
    %v802 = vsel %vm125, %v786, 0.0
    %803 = vadd.xlane.f32.xlu0 %v802
    %v804 = vpop.xlane.xlu0 %803
    %v805 = vsel %vm125, %v787, 0.0
    %806 = vadd.xlane.f32.xlu0 %v805
    %v807 = vpop.xlane.xlu0 %806
    %v808 = vsel %vm125, %v788, 0.0
    %809 = vadd.xlane.f32.xlu0 %v808
    %v810 = vpop.xlane.xlu0 %809
    %v811 = vsel %vm125, %v789, 0.0
    %812 = vadd.xlane.f32.xlu0 %v811
    %v813 = vpop.xlane.xlu0 %812
    %v814 = vld [vmem:[#allocation4] sm:$0x1]
    %v816 = vlaneseq
    %v817 = vshrl.u32 %v816, 7
    %v818 = vsub.s32 0, %v817
    %v819 = vrot.slane %v814, %v818
    %820 = vset.pattern.permute.xlu0 0
    %821 = vperm.xlu0 %820, %v819
    %v822 = vpop.permute.xlu0 %821
    %v824 = vadd.f32 %v792, %v822
    %v825 = vadd.f32 %v795, %v822
    %v826 = vadd.f32 %v798, %v822
    %v827 = vadd.f32 %v801, %v822
    %v828 = vadd.f32 %v804, %v822
    %v829 = vadd.f32 %v807, %v822
    %v830 = vadd.f32 %v810, %v822
    %v831 = vadd.f32 %v813, %v822
    %v832 = vsub.f32 0.0, %v824
    %v833 = vsub.f32 0.0, %v825
    %v834 = vsub.f32 0.0, %v826
    %v835 = vsub.f32 0.0, %v827
    %v836 = vsub.f32 0.0, %v828
    %v837 = vsub.f32 0.0, %v829
    %v838 = vsub.f32 0.0, %v830
    %v839 = vsub.f32 0.0, %v831
    %v840 = vmul.f32 %v832, 1.442695
    %v841 = vpow.pop %v840
    %v842 = vmul.f32 %v833, 1.442695
    %v843 = vpow.pop %v842
    %v844 = vmul.f32 %v834, 1.442695
    %v845 = vpow.pop %v844
    %v846 = vmul.f32 %v835, 1.442695
    %v847 = vpow.pop %v846
    %v848 = vmul.f32 %v836, 1.442695
    %v849 = vpow.pop %v848
    %v850 = vmul.f32 %v837, 1.442695
    %v851 = vpow.pop %v850
    %v852 = vmul.f32 %v838, 1.442695
    %v853 = vpow.pop %v852
    %v854 = vmul.f32 %v839, 1.442695
    %v855 = vpow.pop %v854
    %v856 = vadd.f32 %v841, 1.0
    %v857 = vadd.f32 %v843, 1.0
    %v858 = vadd.f32 %v845, 1.0
    %v859 = vadd.f32 %v847, 1.0
    %v860 = vadd.f32 %v849, 1.0
    %v861 = vadd.f32 %v851, 1.0
    %v862 = vadd.f32 %v853, 1.0
    %v863 = vadd.f32 %v855, 1.0
    %v864 = vrcp.pop %v856
    %v865 = vmul.f32 1.0, %v864
    %v866 = vrcp.pop %v857
    %v867 = vmul.f32 1.0, %v866
    %v868 = vrcp.pop %v858
    %v869 = vmul.f32 1.0, %v868
    %v870 = vrcp.pop %v859
    %v871 = vmul.f32 1.0, %v870
    %v872 = vrcp.pop %v860
    %v873 = vmul.f32 1.0, %v872
    %v874 = vrcp.pop %v861
    %v875 = vmul.f32 1.0, %v874
    %v876 = vrcp.pop %v862
    %v877 = vmul.f32 1.0, %v876
    %v878 = vrcp.pop %v863
    %v879 = vmul.f32 1.0, %v878
    %v888 = vlaneseq
    %v889 = vand.u32 %v888, 127
    %v890 = vlaneseq
    %v891 = vshrl.u32 %v890, 7
    %v892 = vsub.s32 %v889, %v891
    %v893 = vrot.slane %v865, %v892
    %v894 = vlaneseq
    %v895 = vshrl.u32 %v894, 7
    %v896 = vsub.s32 %v889, %v895
    %v897 = vrot.slane %v867, %v896
    %v898 = vlaneseq
    %v899 = vshrl.u32 %v898, 7
    %v900 = vsub.s32 %v889, %v899
    %v901 = vrot.slane %v869, %v900
    %v902 = vlaneseq
    %v903 = vshrl.u32 %v902, 7
    %v904 = vsub.s32 %v889, %v903
    %v905 = vrot.slane %v871, %v904
    %v906 = vlaneseq
    %v907 = vshrl.u32 %v906, 7
    %v908 = vsub.s32 %v889, %v907
    %v909 = vrot.slane %v873, %v908
    %v910 = vlaneseq
    %v911 = vshrl.u32 %v910, 7
    %v912 = vsub.s32 %v889, %v911
    %v913 = vrot.slane %v875, %v912
    %v914 = vlaneseq
    %v915 = vshrl.u32 %v914, 7
    %v916 = vsub.s32 %v889, %v915
    %v917 = vrot.slane %v877, %v916
    %v918 = vlaneseq
    %v919 = vshrl.u32 %v918, 7
    %v920 = vsub.s32 %v889, %v919
    %v921 = vrot.slane %v879, %v920
    %vm922 = vcmask 1041409
    %v923 = vsel %vm922, %v897, %v893
    %vm924 = vcmask 1042434
    %v925 = vsel %vm924, %v901, %v923
    %vm926 = vcmask 1043459
    %v927 = vsel %vm926, %v905, %v925
    %vm928 = vcmask 1044484
    %v929 = vsel %vm928, %v909, %v927
    %vm930 = vcmask 1045509
    %v931 = vsel %vm930, %v913, %v929
    %vm932 = vcmask 1046534
    %v933 = vsel %vm932, %v917, %v931
    %vm934 = vcmask 1047559
    %v935 = vsel %vm934, %v921, %v933
    %vm937 = vcmask 15360
    %938 = vst.msk [vmem:[%s7] sm:$0xff] %vm937, %v935
    // Predicated region
    $region34: #{tpu_custom_call.1} parent=1 // pred_check
      _
    $region35: #{tpu_custom_call.1} parent=1 // pred_check_branch
      %940 = sbr.rel (0) target = $region37
    $region36: #{tpu_custom_call.1} parent=1 // pred_region
      _
    $region37: #{tpu_custom_call.1} parent=1 // pred_fallthru
      _
    // Predicated region
    $region38: #{tpu_custom_call.1} parent=1 // pred_check
      _
    $region39: #{tpu_custom_call.1} parent=1 // pred_check_branch
      %942 = sbr.rel (0) target = $region41
    $region40: #{tpu_custom_call.1} parent=1 // pred_region
      %s944 = ssub.s32 32, 32
      %945 = vsyncadd [#allocation7], %s944
      %s947 = sshll.u32 [#allocation8], 4
      %s948 = int_to_ptr.vmem [resolvable:$true] %s947
      %950 = dma.vmem_to_hbm [thread:$0]  %s948, 32, %s8, [#allocation7]
    $region41: #{tpu_custom_call.1} parent=1 // pred_fallthru
      _
    // Predicated region
    $region42: #{tpu_custom_call.1} parent=1 // pred_check
      _
    $region43: #{tpu_custom_call.1} parent=1 // pred_check_branch
      %952 = sbr.rel (0) target = $region45
    $region44: #{tpu_custom_call.1} parent=1 // pred_region
      _
    $region45: #{tpu_custom_call.1} parent=1 // pred_fallthru
      _
    // Predicated region
    $region46: #{tpu_custom_call.1} parent=1 // pred_check
      _
    $region47: #{tpu_custom_call.1} parent=1 // pred_check_branch
      %954 = sbr.rel (0) target = $region49
    $region48: #{tpu_custom_call.1} parent=1 // pred_region
      %955 = dma.done [#allocation7], 32
    $region49: #{tpu_custom_call.1} parent=1 // pred_fallthru
      _
    %956 = vsyncpa [#allocation6], 1
    %957 = vsyncpa [#allocation7], 1

</llo_original>
